<compile_context>
chip_gen: v6e
topology: v6e:2x2x1
jax: 0.10.0
libtpu: 0.0.40
codegen_flags: <defaults>
</compile_context>

<pallas_src>
import numpy as np
import jax
import jax.numpy as jnp
from jax.experimental import pallas as pl
from jax.experimental.pallas import tpu as pltpu

# ----------------------------- config ---------------------------------------
KERNEL_SIZE = 3
PAD = (KERNEL_SIZE - 1) // 2           # == 1
STRIDE = 2
NUM_LAYERS = 2
SKELETON_DIST = 2
CHANNEL_BASE = [4, 8, 16]              # 4 * 2**i (quaternion)
TOPOLOGY0 = [[0, 1], [1, 2], [0, 3], [3, 4]]   # 4 edges, 5 joints
BATCH = 2
TIME = 16
NEG_SLOPE = 0.2


# ------------------------ skeleton graph helpers ----------------------------
def calc_edge_mat(edges):
    n = len(edges)
    INF = 10 ** 6
    mat = [[INF] * n for _ in range(n)]
    for i in range(n):
        mat[i][i] = 0
    for i, a in enumerate(edges):
        for j, b in enumerate(edges):
            if set(a) & set(b):
                mat[i][j] = min(mat[i][j], 1)
    for k in range(n):
        for i in range(n):
            for j in range(n):
                if mat[i][k] + mat[k][j] < mat[i][j]:
                    mat[i][j] = mat[i][k] + mat[k][j]
    return mat


def find_neighbor(edges, d):
    mat = calc_edge_mat(edges)
    n = len(edges)
    nb = [[j for j in range(n) if mat[i][j] <= d] for i in range(n)]
    global_nb = list(nb[0])
    for i in global_nb:
        nb[i].append(n)
    nb.append(global_nb)
    return nb


def build_pool(edges, channels_per_edge, last_pool):
    edge_num = len(edges) + 1
    seq_list, pooling_list, new_edges = [], [], []
    degree = [0] * 200
    for e in edges:
        degree[e[0]] += 1
        degree[e[1]] += 1

    def find_seq(j, seq):
        if degree[j] > 2 and j != 0:
            seq_list.append(seq)
            seq = []
        if degree[j] == 1:
            seq_list.append(seq)
            return
        for idx, e in enumerate(edges):
            if e[0] == j:
                find_seq(e[1], seq + [idx])

    find_seq(0, [])
    for seq in seq_list:
        if last_pool:
            pooling_list.append(seq)
            continue
        if len(seq) % 2 == 1:
            pooling_list.append([seq[0]])
            new_edges.append(edges[seq[0]])
            seq = seq[1:]
        for i in range(0, len(seq), 2):
            pooling_list.append([seq[i], seq[i + 1]])
            new_edges.append([edges[seq[i]][0], edges[seq[i + 1]][1]])
    pooling_list.append([edge_num - 1])

    W = np.zeros((len(pooling_list) * channels_per_edge,
                  edge_num * channels_per_edge), np.float32)
    for i, pair in enumerate(pooling_list):
        for j in pair:
            for c in range(channels_per_edge):
                W[i * channels_per_edge + c, j * channels_per_edge + c] = 1.0 / len(pair)
    return W, new_edges


def build_conv_mask(neighbor_list, in_per_joint, out_per_joint, kernel_size):
    J = len(neighbor_list)
    mask = np.zeros((J * out_per_joint, J * in_per_joint, kernel_size), np.float32)
    for i, nb in enumerate(neighbor_list):
        cols = [k * in_per_joint + c for k in nb for c in range(in_per_joint)]
        mask[i * out_per_joint:(i + 1) * out_per_joint, cols, :] = 1.0
    return mask


# ------------------------- gather-matrix construction ------------------------
def build_reflect_gather(t_in, t_out, batch,
                         kernel_size=KERNEL_SIZE, stride=STRIDE, pad=PAD):
    """0/1 matrix D so that (C, B*t_in) @ D == the reflect-padded, stride-2
    im2col columns, ordered [tap k][batch b][time t]."""
    ncols = batch * t_out
    D = np.zeros((batch * t_in, kernel_size * ncols), np.float32)
    for k in range(kernel_size):
        for b in range(batch):
            for t in range(t_out):
                j = stride * t + k - pad
                if j < 0:                       # reflect left  (pad == 1)
                    j = -j
                if j >= t_in:                   # reflect right (unused here)
                    j = 2 * (t_in - 1) - j
                D[b * t_in + j, k * ncols + b * t_out + t] = 1.0
    return D


# ------------------------------ Pallas kernel -------------------------------
def _make_encoder_kernel(layer_dims, batch, bias_col):
    """One fused, grid-less kernel: all layers and all batch elements.

    layer_dims: tuple of (cin, t_in, t_out, cpool) per layer.
    Refs:
      x_ref : (B, cin0, T0)                              raw input, channel-major
      wb_ref: (L, cpool_max, K*cin_max + 1)              folded weights; last col = bias
      d_ref : (L, B*t_in_max, K*B*t_out_max)             0/1 gather (reflect + stride)
      o_ref : (B, cpool_last, t_out_last)
    """
    n_layers = len(layer_dims)
    t_out_last = layer_dims[-1][2]

    def kernel(x_ref, wb_ref, d_ref, o_ref):
        # Batch-merged channel-major activation value: (cin0, B * T0).
        X = jnp.concatenate([x_ref[b] for b in range(batch)], axis=1)
        for li in range(n_layers):
            cin, t_in, t_out, cpool = layer_dims[li]
            kcin = KERNEL_SIZE * cin
            ncols = batch * t_out
            wb = wb_ref[li, :cpool, :]                       # (cpool, K*cin_max+1)
            w = wb[:, :kcin]                                 # (cpool, K*cin)  exact slice
            bias = wb[:, bias_col:bias_col + 1]              # (cpool, 1)
            d = d_ref[li, :batch * t_in, :KERNEL_SIZE * ncols]   # exact slice, no padding
            # "Gather" matmul: reflect pad + stride-2 tap selection on the MXU.
            g = jnp.dot(X, d, preferred_element_type=jnp.float32)     # (cin, K*ncols)
            # Restack tap blocks (lane slices -> sublane concat) into im2col rows.
            rhs = jnp.concatenate(
                [g[:, k * ncols:(k + 1) * ncols] for k in range(KERNEL_SIZE)],
                axis=0)                                               # (K*cin, B*t_out)
            acc = jnp.dot(w, rhs, preferred_element_type=jnp.float32) + bias
            X = jnp.where(acc >= 0.0, acc, NEG_SLOPE * acc)           # LeakyReLU(0.2)
        for b in range(batch):
            o_ref[b] = X[:, b * t_out_last:(b + 1) * t_out_last]

    return kernel


# --------------------------- parameter building -----------------------------
def build_encoder_params(key):
    topologies = [TOPOLOGY0]
    edge_num = [len(TOPOLOGY0) + 1]
    params = []
    for i in range(NUM_LAYERS):
        nb = find_neighbor(topologies[i], SKELETON_DIST)
        in_ch = CHANNEL_BASE[i] * edge_num[i]
        out_ch = CHANNEL_BASE[i + 1] * edge_num[i]
        in_pj = in_ch // edge_num[i]
        out_pj = out_ch // edge_num[i]
        mask = build_conv_mask(nb, in_pj, out_pj, KERNEL_SIZE)

        key, k1, k2 = jax.random.split(key, 3)
        w = jax.random.normal(k1, (out_ch, in_ch, KERNEL_SIZE), jnp.float32) * 0.1
        b = jax.random.normal(k2, (out_ch,), jnp.float32) * 0.01
        w_masked = w * jnp.asarray(mask)

        last_pool = (i == NUM_LAYERS - 1)
        pool_w_np, new_edges = build_pool(topologies[i], out_ch // len(nb), last_pool)
        params.append((w_masked, b, jnp.asarray(pool_w_np)))

        topologies.append(new_edges)
        edge_num.append(len(new_edges) + 1)
    return params


def fold_and_pack_params(params, actual_in_channels, time, batch):
    """Fold SkeletonPool + zero-channel into the conv weights, pack everything
    into two zero-padded operand tensors, and build the gather matrices."""
    folded, layer_dims = [], []
    t_in, cin = time, actual_in_channels
    for li, (w_masked, bias, pool_w) in enumerate(params):
        w = np.asarray(w_masked)                 # (cout, cin_conv, K)
        b = np.asarray(bias)                     # (cout,)
        p = np.asarray(pool_w)                   # (cpool, cout)
        if li == 0:
            # PyTorch appends one all-zero channel; it contributes nothing, so
            # drop its weight column and feed the raw 19-channel input.
            w = w[:, :cin, :]
        assert w.shape[1] == cin
        cpool = p.shape[0]
        # P (W x + b) == (P W) x + P b ; rows ordered [tap k][channel c].
        w_cm = np.einsum('po,ock->pkc', p, w).reshape(cpool, KERNEL_SIZE * cin)
        b_cm = p @ b
        t_out = (t_in + 2 * PAD - KERNEL_SIZE) // STRIDE + 1
        folded.append((w_cm.astype(np.float32), b_cm.astype(np.float32)))
        layer_dims.append((cin, t_in, t_out, cpool))
        cin, t_in = cpool, t_out

    L = len(layer_dims)
    kcin_max = max(KERNEL_SIZE * d[0] for d in layer_dims)
    cpool_max = max(d[3] for d in layer_dims)
    tin_max = max(d[1] for d in layer_dims)
    tout_max = max(d[2] for d in layer_dims)

    wb = np.zeros((L, cpool_max, kcin_max + 1), np.float32)
    dm = np.zeros((L, batch * tin_max, KERNEL_SIZE * batch * tout_max), np.float32)
    for li, ((w_cm, b_cm), (cin_l, tin_l, tout_l, cpool_l)) in enumerate(
            zip(folded, layer_dims)):
        wb[li, :cpool_l, :KERNEL_SIZE * cin_l] = w_cm
        wb[li, :cpool_l, kcin_max] = b_cm
        dm[li, :batch * tin_l, :KERNEL_SIZE * batch * tout_l] = \
            build_reflect_gather(tin_l, tout_l, batch)
    return jnp.asarray(wb), jnp.asarray(dm), tuple(layer_dims), kcin_max


# ------------------------------ forward passes ------------------------------
def encoder_forward_pallas(x, wb_packed, d_packed, layer_dims, bias_col):
    batch = x.shape[0]
    cpool_last, t_out_last = layer_dims[-1][3], layer_dims[-1][2]
    kernel = _make_encoder_kernel(layer_dims, batch, bias_col)
    vmem = lambda: pl.BlockSpec(memory_space=pltpu.MemorySpace.VMEM)
    return pl.pallas_call(
        kernel,
        out_shape=jax.ShapeDtypeStruct((batch, cpool_last, t_out_last), jnp.float32),
        in_specs=[vmem(), vmem(), vmem()],
        out_specs=vmem(),
    )(x, wb_packed, d_packed)


def encoder_reference(x, params):
    """Pure-JAX reference, matching the PyTorch forward exactly."""
    h = jnp.concatenate([x, jnp.zeros_like(x[:, :1, :])], axis=1)
    for (w_masked, bias, pool_w) in params:
        hp = jnp.pad(h, ((0, 0), (0, 0), (PAD, PAD)), mode='reflect')
        conv = jax.lax.conv_general_dilated(
            hp, w_masked, window_strides=(STRIDE,), padding='VALID',
            dimension_numbers=('NCH', 'OIH', 'NCH')) + bias[None, :, None]
        pooled = jnp.einsum('pc,bct->bpt', pool_w, conv)
        h = jnp.where(pooled >= 0, pooled, NEG_SLOPE * pooled)
    return h


# ---------------------------------- main -------------------------------------
if __name__ == "__main__":
    key = jax.random.PRNGKey(0)
    key, pkey, xkey = jax.random.split(key, 3)
    params = build_encoder_params(pkey)

    # input channels = 4 * num_edges + 3 (quaternions per edge + root position)
    in_channels = 4 * len(TOPOLOGY0) + 3        # 19 (zero channel folded into weights)
    wb_packed, d_packed, layer_dims, bias_col = fold_and_pack_params(
        params, in_channels, TIME, BATCH)

    x = jax.random.normal(xkey, (BATCH, in_channels, TIME), jnp.float32)

    fwd = jax.jit(lambda a: encoder_forward_pallas(
        a, wb_packed, d_packed, layer_dims, bias_col))
    out = jax.block_until_ready(fwd(x))

    ref = jax.block_until_ready(encoder_reference(x, params))
    assert out.shape == ref.shape, (out.shape, ref.shape)
    np.testing.assert_allclose(np.asarray(out), np.asarray(ref), atol=1e-4, rtol=1e-4)

    print("KERNEL_OK")
</pallas_src>

<mosaic_0001>
module attributes {stable_mosaic.version = 11 : i64} {
  func.func @kernel(%arg0: memref<2x19x16xf32, #tpu.memory_space<vmem>>, %arg1: memref<2x48x73xf32, #tpu.memory_space<vmem>>, %arg2: memref<2x32x48xf32, #tpu.memory_space<vmem>>, %arg3: memref<2x48x4xf32, #tpu.memory_space<vmem>>) attributes {dimension_semantics = [], scalar_prefetch = 0 : i64, scratch_operands = 0 : i64, tpu.core_type = #tpu.core_type<tc>} {
    %c0 = arith.constant 0 : index
    %c0_0 = arith.constant 0 : index
    %c0_1 = arith.constant 0 : index
    %0 = vector.load %arg0[%c0, %c0_0, %c0_1] : memref<2x19x16xf32, #tpu.memory_space<vmem>>, vector<1x19x16xf32>
    %1 = vector.shape_cast %0 : vector<1x19x16xf32> to vector<19x16xf32>
    %c1 = arith.constant 1 : index
    %c0_2 = arith.constant 0 : index
    %c0_3 = arith.constant 0 : index
    %2 = vector.load %arg0[%c1, %c0_2, %c0_3] : memref<2x19x16xf32, #tpu.memory_space<vmem>>, vector<1x19x16xf32>
    %3 = vector.shape_cast %2 : vector<1x19x16xf32> to vector<19x16xf32>
    %4 = tpu.concatenate %1, %3 in 1 : vector<19x16xf32>, vector<19x16xf32> -> vector<19x32xf32>
    %c0_4 = arith.constant 0 : index
    %c0_5 = arith.constant 0 : index
    %c0_6 = arith.constant 0 : index
    %5 = vector.load %arg1[%c0_4, %c0_5, %c0_6] : memref<2x48x73xf32, #tpu.memory_space<vmem>>, vector<1x24x73xf32>
    %6 = vector.shape_cast %5 : vector<1x24x73xf32> to vector<24x73xf32>
    %7 = vector.extract_strided_slice %6 {offsets = [0, 0], sizes = [24, 57], strides = [1, 1]} : vector<24x73xf32> to vector<24x57xf32>
    %8 = vector.extract_strided_slice %6 {offsets = [0, 72], sizes = [24, 1], strides = [1, 1]} : vector<24x73xf32> to vector<24x1xf32>
    %c0_7 = arith.constant 0 : index
    %c0_8 = arith.constant 0 : index
    %c0_9 = arith.constant 0 : index
    %9 = vector.load %arg2[%c0_7, %c0_8, %c0_9] : memref<2x32x48xf32, #tpu.memory_space<vmem>>, vector<1x32x48xf32>
    %10 = vector.shape_cast %9 : vector<1x32x48xf32> to vector<32x48xf32>
    %cst = arith.constant dense<0.000000e+00> : vector<19x48xf32>
    %11 = tpu.matmul %4, %10, %cst {dimension_numbers = #tpu.dot_dimension_numbers<[1], [0], [0], [1], [0, 0, 1, 1], [], []>} : vector<19x32xf32>, vector<32x48xf32>, vector<19x48xf32> -> vector<19x48xf32>
    %12 = vector.extract_strided_slice %11 {offsets = [0, 0], sizes = [19, 16], strides = [1, 1]} : vector<19x48xf32> to vector<19x16xf32>
    %13 = vector.extract_strided_slice %11 {offsets = [0, 16], sizes = [19, 16], strides = [1, 1]} : vector<19x48xf32> to vector<19x16xf32>
    %14 = vector.extract_strided_slice %11 {offsets = [0, 32], sizes = [19, 16], strides = [1, 1]} : vector<19x48xf32> to vector<19x16xf32>
    %15 = tpu.concatenate %12, %13, %14 in 0 : vector<19x16xf32>, vector<19x16xf32>, vector<19x16xf32> -> vector<57x16xf32>
    %cst_10 = arith.constant dense<0.000000e+00> : vector<24x16xf32>
    %16 = tpu.matmul %7, %15, %cst_10 {dimension_numbers = #tpu.dot_dimension_numbers<[1], [0], [0], [1], [0, 0, 1, 1], [], []>} : vector<24x57xf32>, vector<57x16xf32>, vector<24x16xf32> -> vector<24x16xf32>
    %17 = vector.broadcast %8 : vector<24x1xf32> to vector<24x16xf32>
    %18 = arith.addf %16, %17 : vector<24x16xf32>
    %cst_11 = arith.constant 0.000000e+00 : f32
    %19 = vector.broadcast %cst_11 : f32 to vector<24x16xf32>
    %20 = arith.cmpf oge, %18, %19 : vector<24x16xf32>
    %cst_12 = arith.constant 2.000000e-01 : f32
    %21 = vector.broadcast %cst_12 : f32 to vector<24x16xf32>
    %22 = arith.mulf %21, %18 : vector<24x16xf32>
    %23 = arith.select %20, %18, %22 : vector<24x16xi1>, vector<24x16xf32>
    %c1_13 = arith.constant 1 : index
    %c0_14 = arith.constant 0 : index
    %c0_15 = arith.constant 0 : index
    %24 = vector.load %arg1[%c1_13, %c0_14, %c0_15] : memref<2x48x73xf32, #tpu.memory_space<vmem>>, vector<1x48x73xf32>
    %25 = vector.shape_cast %24 : vector<1x48x73xf32> to vector<48x73xf32>
    %26 = vector.extract_strided_slice %25 {offsets = [0, 0], sizes = [48, 72], strides = [1, 1]} : vector<48x73xf32> to vector<48x72xf32>
    %27 = vector.extract_strided_slice %25 {offsets = [0, 72], sizes = [48, 1], strides = [1, 1]} : vector<48x73xf32> to vector<48x1xf32>
    %c1_16 = arith.constant 1 : index
    %c0_17 = arith.constant 0 : index
    %c0_18 = arith.constant 0 : index
    %28 = vector.load %arg2[%c1_16, %c0_17, %c0_18] : memref<2x32x48xf32, #tpu.memory_space<vmem>>, vector<1x16x24xf32>
    %29 = vector.shape_cast %28 : vector<1x16x24xf32> to vector<16x24xf32>
    %cst_19 = arith.constant dense<0.000000e+00> : vector<24x24xf32>
    %30 = tpu.matmul %23, %29, %cst_19 {dimension_numbers = #tpu.dot_dimension_numbers<[1], [0], [0], [1], [0, 0, 1, 1], [], []>} : vector<24x16xf32>, vector<16x24xf32>, vector<24x24xf32> -> vector<24x24xf32>
    %31 = vector.extract_strided_slice %30 {offsets = [0, 0], sizes = [24, 8], strides = [1, 1]} : vector<24x24xf32> to vector<24x8xf32>
    %32 = vector.extract_strided_slice %30 {offsets = [0, 8], sizes = [24, 8], strides = [1, 1]} : vector<24x24xf32> to vector<24x8xf32>
    %33 = vector.extract_strided_slice %30 {offsets = [0, 16], sizes = [24, 8], strides = [1, 1]} : vector<24x24xf32> to vector<24x8xf32>
    %34 = tpu.concatenate %31, %32, %33 in 0 : vector<24x8xf32>, vector<24x8xf32>, vector<24x8xf32> -> vector<72x8xf32>
    %cst_20 = arith.constant dense<0.000000e+00> : vector<48x8xf32>
    %35 = tpu.matmul %26, %34, %cst_20 {dimension_numbers = #tpu.dot_dimension_numbers<[1], [0], [0], [1], [0, 0, 1, 1], [], []>} : vector<48x72xf32>, vector<72x8xf32>, vector<48x8xf32> -> vector<48x8xf32>
    %36 = vector.broadcast %27 : vector<48x1xf32> to vector<48x8xf32>
    %37 = arith.addf %35, %36 : vector<48x8xf32>
    %cst_21 = arith.constant 0.000000e+00 : f32
    %38 = vector.broadcast %cst_21 : f32 to vector<48x8xf32>
    %39 = arith.cmpf oge, %37, %38 : vector<48x8xf32>
    %cst_22 = arith.constant 2.000000e-01 : f32
    %40 = vector.broadcast %cst_22 : f32 to vector<48x8xf32>
    %41 = arith.mulf %40, %37 : vector<48x8xf32>
    %42 = arith.select %39, %37, %41 : vector<48x8xi1>, vector<48x8xf32>
    %43 = vector.extract_strided_slice %42 {offsets = [0, 0], sizes = [48, 4], strides = [1, 1]} : vector<48x8xf32> to vector<48x4xf32>
    %c0_23 = arith.constant 0 : index
    %c0_24 = arith.constant 0 : index
    %c0_25 = arith.constant 0 : index
    %44 = vector.load %arg3[%c0_23, %c0_24, %c0_25] : memref<2x48x4xf32, #tpu.memory_space<vmem>>, vector<1x48x4xf32>
    %45 = vector.shape_cast %44 : vector<1x48x4xf32> to vector<48x4xf32>
    %46 = vector.shape_cast %43 : vector<48x4xf32> to vector<1x48x4xf32>
    tpu.vector_store %arg3[%c0_23, %c0_24, %c0_25], %46 {strides = array<i32>} : memref<2x48x4xf32, #tpu.memory_space<vmem>>, vector<1x48x4xf32>,
    %47 = vector.extract_strided_slice %42 {offsets = [0, 4], sizes = [48, 4], strides = [1, 1]} : vector<48x8xf32> to vector<48x4xf32>
    %c1_26 = arith.constant 1 : index
    %c0_27 = arith.constant 0 : index
    %c0_28 = arith.constant 0 : index
    %48 = vector.load %arg3[%c1_26, %c0_27, %c0_28] : memref<2x48x4xf32, #tpu.memory_space<vmem>>, vector<1x48x4xf32>
    %49 = vector.shape_cast %48 : vector<1x48x4xf32> to vector<48x4xf32>
    %50 = vector.shape_cast %47 : vector<48x4xf32> to vector<1x48x4xf32>
    tpu.vector_store %arg3[%c1_26, %c0_27, %c0_28], %50 {strides = array<i32>} : memref<2x48x4xf32, #tpu.memory_space<vmem>>, vector<1x48x4xf32>,
    return
  }
}

</mosaic_0001>

<llo_original>
// kernel: _lambda_.1
$region0: #{_lambda_.1}
  #allocation0 [shape = 'u32[]', space=smem, size = 0x4, offset = 0x4, fixed_abs, tag = 'smem constant byte address 0x4 - core index']
  #allocation1 [shape = 'u32[144,128]{1,0:T(1,128)}', space=vmem, size = 0x12000, scoped, tag = 'internal scratch']
  %s0 = inlined_call_operand.vmem [shape: f32[2,19,16], index: 0, kind: input, shape index: {}]
  %s1 = inlined_call_operand.hbm [shape: f32[2,48,73], index: 1, kind: input, shape index: {}]
  %s2 = inlined_call_operand.vmem [shape: f32[2,32,48], index: 2, kind: input, shape index: {}]
  %s3 = inlined_call_operand.vmem [shape: f32[2,48,4], index: 3, kind: output, shape index: {}]
  %s4 = sld [smem:[#allocation0]]
  $region26: #{_lambda_.1} parent=0
    _
  %s6 = ssub.s32 1, %s4
  %s7 = scalar_select 0, %s6, %s4
  $region1: #{_lambda_.1} parent=0
    #allocation2 [shape = 'u8[49152]{0}', space=vmem, size = 0xc000, scoped, tag = 'input window, operand 1, single buffered']
    #allocation3 [shape = 's32[1]{0}', space=sflag, size = 0x4, scoped, tag = 'scoped memory for _lambda_.1']
    %8 = vsyncpa [#allocation3], 0
    // Predicated region
    $region2: #{_lambda_.1} parent=1 // pred_check
      _
    $region3: #{_lambda_.1} parent=1 // pred_check_branch
      %10 = sbr.rel (0) target = $region5
    $region4: #{_lambda_.1} parent=1 // pred_region
      _
    $region5: #{_lambda_.1} parent=1 // pred_fallthru
      _
    // Predicated region
    $region6: #{_lambda_.1} parent=1 // pred_check
      _
    $region7: #{_lambda_.1} parent=1 // pred_check_branch
      %12 = sbr.rel (0) target = $region9
    $region8: #{_lambda_.1} parent=1 // pred_region
      %s14 = ssub.s32 1536, 1536
      %15 = vsyncadd [#allocation3], %s14
      %s16 = sshll.u32 [#allocation2], 4
      %s17 = int_to_ptr.vmem [resolvable:$true] %s16
      %22 = dma.hbm_to_vmem [thread:$0]  %s1, 1536, %s17, [#allocation3], 128, 128, 8
    $region9: #{_lambda_.1} parent=1 // pred_fallthru
      _
    // Predicated region
    $region10: #{_lambda_.1} parent=1 // pred_check
      _
    $region11: #{_lambda_.1} parent=1 // pred_check_branch
      %24 = sbr.rel (0) target = $region13
    $region12: #{_lambda_.1} parent=1 // pred_region
      _
    $region13: #{_lambda_.1} parent=1 // pred_fallthru
      _
    // Predicated region
    $region14: #{_lambda_.1} parent=1 // pred_check
      _
    $region15: #{_lambda_.1} parent=1 // pred_check_branch
      %26 = sbr.rel (0) target = $region17
    $region16: #{_lambda_.1} parent=1 // pred_region
      %27 = dma.done [#allocation3], 1536
    $region17: #{_lambda_.1} parent=1 // pred_fallthru
      _
    %v28 = vld [vmem:[%s0] sm:$0xff]
    %v29 = vld [vmem:[%s0 + $0x8] sm:$0xff]
    %v30 = vld [vmem:[%s0 + $0x10] sm:$0x7]
    %s31 = scalar_lea.vmem %s0, 24
    %v32 = vld [vmem:[%s31] sm:$0xff]
    %v33 = vld [vmem:[%s31 + $0x8] sm:$0xff]
    %v34 = vld [vmem:[%s31 + $0x10] sm:$0x7]
    %38 = vrot.lane.b32.xlu0 %v32, 16
    %v39 = vpop.permute.xlu0 %38
    %40 = vrot.lane.b32.xlu0 %v33, 16
    %v41 = vpop.permute.xlu0 %40
    %42 = vrot.lane.b32.xlu0 %v34, 16
    %v43 = vpop.permute.xlu0 %42
    %vm47 = vcmask 130048
    %v48 = vsel %vm47, %v28, %v39
    %v49 = vsel %vm47, %v29, %v41
    %v50 = vsel %vm47, %v30, %v43
    %v51 = vld [vmem:[#allocation2] sm:$0xff]
    %v52 = vld [vmem:[#allocation2 + $0x8] sm:$0xff]
    %v53 = vld [vmem:[#allocation2 + $0x10] sm:$0xff]
    %v54 = vld [vmem:[%s2] sm:$0xff]
    %v55 = vld [vmem:[%s2 + $0x8] sm:$0xff]
    %v56 = vld [vmem:[%s2 + $0x10] sm:$0xff]
    %v57 = vld [vmem:[%s2 + $0x18] sm:$0xff]
    %vm58 = vcmask 261120
    %v60 = vsel %vm58, %v48, 0
    %v63 = vsel %vm58, %v49, 0
    %v66 = vsel %vm58, %v50, 0
    %68 = vmatprep.subr.mxu0 0.0
    %69 = vmatpush1.msra.mxu0 0.0
    %70 = vmatprep.subr.mxu0 0.0
    %71 = vmatpush1.msra.mxu0 0.0
    %72 = vmatprep.subr.mxu0 0.0
    %73 = vmatpush1.msra.mxu0 0.0
    %74 = vmatprep.subr.mxu0 0.0
    %75 = vmatpush1.msra.mxu0 0.0
    %76 = vmatprep.subr.mxu0 0.0
    %77 = vmatpush1.msra.mxu0 0.0
    %78 = vmatprep.subr.mxu0 0.0
    %79 = vmatpush1.msra.mxu0 0.0
    %80 = vmatprep.subr.mxu0 0.0
    %81 = vmatpush1.msra.mxu0 0.0
    %82 = vmatprep.subr.mxu0 0.0
    %83 = vmatpush1.msra.mxu0 0.0
    %84 = vmatprep.subr.mxu0 0.0
    %85 = vmatpush1.msra.mxu0 0.0
    %86 = vmatprep.subr.mxu0 0.0
    %87 = vmatpush1.msra.mxu0 0.0
    %88 = vmatprep.subr.mxu0 0.0
    %89 = vmatpush1.msra.mxu0 0.0
    %90 = vmatprep.subr.mxu0 0.0
    %91 = vmatpush1.msra.mxu0 0.0
    %92 = vmatprep.subr.mxu0 0.0
    %93 = vmatpush1.msra.mxu0 %v57
    %94 = vmatprep.subr.mxu0 0.0
    %95 = vmatpush1.msra.mxu0 %v56
    %96 = vmatprep.subr.mxu0 0.0
    %97 = vmatpush1.msra.mxu0 %v55
    %98 = vmatprep.subr.mxu0 0.0
    %99 = vmatpush1.msra.mxu0 %v54
    %100 = vmatprep.subr.mxu0 0.0
    %101 = vmatpush2.msra.mxu0 0.0
    %102 = vmatprep.subr.mxu0 0.0
    %103 = vmatpush2.msra.mxu0 0.0
    %104 = vmatprep.subr.mxu0 0.0
    %105 = vmatpush2.msra.mxu0 0.0
    %106 = vmatprep.subr.mxu0 0.0
    %107 = vmatpush2.msra.mxu0 0.0
    %108 = vmatprep.subr.mxu0 0.0
    %109 = vmatpush2.msra.mxu0 0.0
    %110 = vmatprep.subr.mxu0 0.0
    %111 = vmatpush2.msra.mxu0 0.0
    %112 = vmatprep.subr.mxu0 0.0
    %113 = vmatpush2.msra.mxu0 0.0
    %114 = vmatprep.subr.mxu0 0.0
    %115 = vmatpush2.msra.mxu0 0.0
    %116 = vmatprep.subr.mxu0 0.0
    %117 = vmatpush2.msra.mxu0 0.0
    %118 = vmatprep.subr.mxu0 0.0
    %119 = vmatpush2.msra.mxu0 0.0
    %120 = vmatprep.subr.mxu0 0.0
    %121 = vmatpush2.msra.mxu0 0.0
    %122 = vmatprep.subr.mxu0 0.0
    %123 = vmatpush2.msra.mxu0 0.0
    %124 = vmatprep.subr.mxu0 0.0
    %125 = vmatpush2.msra.mxu0 0.0
    %126 = vmatprep.subr.mxu0 0.0
    %127 = vmatpush2.msra.mxu0 0.0
    %128 = vmatprep.subr.mxu0 0.0
    %129 = vmatpush2.msra.mxu0 0.0
    %130 = vmatprep.subr.mxu0 0.0
    %131 = vmatpush2.msra.mxu0 0.0
    %132 = vmatprep.mubr.f32.mxu0 0.0
    %133 = vmatmul.mubr.f32.gmra.mxu0 %v60
    %v134 = vpop.f32.mrf.mxu0
    %v135 = vadd.f32 0.0, %v134
    %v136 = vpop.f32.mrf.mxu0
    %137 = vmatprep.mubr.f32.mxu0 0.0
    %138 = vmatmul.mubr.f32.gmra.mxu0 %v63
    %v139 = vpop.f32.mrf.mxu0
    %v140 = vadd.f32 0.0, %v139
    %v141 = vpop.f32.mrf.mxu0
    %142 = vmatprep.mubr.f32.mxu0 0.0
    %143 = vmatmul.mubr.f32.gmra.mxu0 %v66
    %v144 = vpop.f32.mrf.mxu0
    %v145 = vadd.f32 0.0, %v144
    %v146 = vpop.f32.mrf.mxu0
    %147 = vdwg.mxu0
    %vm151 = vcmask 1042432
    %v152 = vrot.slane %v135, 5
    %v153 = vrot.slane %v140, 5
    %v154 = vsel %vm151, %v152, %v153
    %v155 = vrot.slane %v145, 5
    %v156 = vsel %vm151, %v153, %v155
    %157 = vrot.lane.b32.xlu0 %v152, 112
    %v158 = vpop.permute.xlu0 %157
    %159 = vrot.lane.b32.xlu0 %v154, 112
    %v160 = vpop.permute.xlu0 %159
    %161 = vrot.lane.b32.xlu0 %v156, 112
    %v162 = vpop.permute.xlu0 %161
    %vm166 = vcmask 1045504
    %v167 = vrot.slane %v135, 2
    %v168 = vrot.slane %v140, 2
    %v169 = vsel %vm166, %v167, %v168
    %v170 = vrot.slane %v145, 2
    %v171 = vsel %vm166, %v168, %v170
    %172 = vrot.lane.b32.xlu0 %v167, 96
    %v173 = vpop.permute.xlu0 %172
    %174 = vrot.lane.b32.xlu0 %v169, 96
    %v175 = vpop.permute.xlu0 %174
    %176 = vrot.lane.b32.xlu0 %v171, 96
    %v177 = vpop.permute.xlu0 %176
    %178 = vrot.lane.b32.xlu0 %v170, 96
    %v179 = vpop.permute.xlu0 %178
    %v183 = vsel %vm151, %v145, %v158
    %v184 = vsel %vm166, %v162, %v173
    %186 = vset.pattern.permute.xlu0 72
    %187 = vperm.xlu0 %186, %v51
    %v188 = vpop.permute.xlu0 %187
    %191 = vset.pattern.permute.xlu0 72
    %192 = vperm.xlu0 %191, %v52
    %v193 = vpop.permute.xlu0 %192
    %196 = vset.pattern.permute.xlu0 72
    %197 = vperm.xlu0 %196, %v53
    %v198 = vpop.permute.xlu0 %197
    %vm200 = vcmask 465920
    %v201 = vsel %vm200, %v51, 0
    %v203 = vsel %vm200, %v52, 0
    %v205 = vsel %vm200, %v53, 0
    %vm207 = vcmask 1040384
    %v208 = vsel %vm207, %v179, 0
    %210 = vmatprep.subr.mxu0 0.0
    %211 = vmatpush1.msra.mxu0 0.0
    %212 = vmatprep.subr.mxu0 0.0
    %213 = vmatpush1.msra.mxu0 0.0
    %214 = vmatprep.subr.mxu0 0.0
    %215 = vmatpush1.msra.mxu0 0.0
    %216 = vmatprep.subr.mxu0 0.0
    %217 = vmatpush1.msra.mxu0 0.0
    %218 = vmatprep.subr.mxu0 0.0
    %219 = vmatpush1.msra.mxu0 0.0
    %220 = vmatprep.subr.mxu0 0.0
    %221 = vmatpush1.msra.mxu0 0.0
    %222 = vmatprep.subr.mxu0 0.0
    %223 = vmatpush1.msra.mxu0 0.0
    %224 = vmatprep.subr.mxu0 0.0
    %225 = vmatpush1.msra.mxu0 0.0
    %226 = vmatprep.subr.mxu0 0.0
    %227 = vmatpush1.msra.mxu0 %v208
    %228 = vmatprep.subr.mxu0 0.0
    %229 = vmatpush1.msra.mxu0 %v177
    %230 = vmatprep.subr.mxu0 0.0
    %231 = vmatpush1.msra.mxu0 %v175
    %232 = vmatprep.subr.mxu0 0.0
    %233 = vmatpush1.msra.mxu0 %v184
    %234 = vmatprep.subr.mxu0 0.0
    %235 = vmatpush1.msra.mxu0 %v160
    %236 = vmatprep.subr.mxu0 0.0
    %237 = vmatpush1.msra.mxu0 %v183
    %238 = vmatprep.subr.mxu0 0.0
    %239 = vmatpush1.msra.mxu0 %v140
    %240 = vmatprep.subr.mxu0 0.0
    %241 = vmatpush1.msra.mxu0 %v135
    %242 = vmatprep.subr.mxu0 0.0
    %243 = vmatpush2.msra.mxu0 0.0
    %244 = vmatprep.subr.mxu0 0.0
    %245 = vmatpush2.msra.mxu0 0.0
    %246 = vmatprep.subr.mxu0 0.0
    %247 = vmatpush2.msra.mxu0 0.0
    %248 = vmatprep.subr.mxu0 0.0
    %249 = vmatpush2.msra.mxu0 0.0
    %250 = vmatprep.subr.mxu0 0.0
    %251 = vmatpush2.msra.mxu0 0.0
    %252 = vmatprep.subr.mxu0 0.0
    %253 = vmatpush2.msra.mxu0 0.0
    %254 = vmatprep.subr.mxu0 0.0
    %255 = vmatpush2.msra.mxu0 0.0
    %256 = vmatprep.subr.mxu0 0.0
    %257 = vmatpush2.msra.mxu0 0.0
    %258 = vmatprep.subr.mxu0 0.0
    %259 = vmatpush2.msra.mxu0 0.0
    %260 = vmatprep.subr.mxu0 0.0
    %261 = vmatpush2.msra.mxu0 0.0
    %262 = vmatprep.subr.mxu0 0.0
    %263 = vmatpush2.msra.mxu0 0.0
    %264 = vmatprep.subr.mxu0 0.0
    %265 = vmatpush2.msra.mxu0 0.0
    %266 = vmatprep.subr.mxu0 0.0
    %267 = vmatpush2.msra.mxu0 0.0
    %268 = vmatprep.subr.mxu0 0.0
    %269 = vmatpush2.msra.mxu0 0.0
    %270 = vmatprep.subr.mxu0 0.0
    %271 = vmatpush2.msra.mxu0 0.0
    %272 = vmatprep.subr.mxu0 0.0
    %273 = vmatpush2.msra.mxu0 0.0
    %274 = vmatprep.mubr.f32.mxu0 0.0
    %275 = vmatmul.mubr.f32.gmra.mxu0 %v201
    %v276 = vpop.f32.mrf.mxu0
    %v277 = vadd.f32 %v188, %v276
    %v278 = vpop.f32.mrf.mxu0
    %279 = vmatprep.mubr.f32.mxu0 0.0
    %280 = vmatmul.mubr.f32.gmra.mxu0 %v203
    %v281 = vpop.f32.mrf.mxu0
    %v282 = vadd.f32 %v193, %v281
    %v283 = vpop.f32.mrf.mxu0
    %284 = vmatprep.mubr.f32.mxu0 0.0
    %285 = vmatmul.mubr.f32.gmra.mxu0 %v205
    %v286 = vpop.f32.mrf.mxu0
    %v287 = vadd.f32 %v198, %v286
    %v288 = vpop.f32.mrf.mxu0
    %289 = vdwg.mxu0
    %vm290 = vcmp.ge.f32.partialorder %v277, 0.0
    %vm291 = vcmp.ge.f32.partialorder %v282, 0.0
    %vm292 = vcmp.ge.f32.partialorder %v287, 0.0
    %v293 = vmul.f32 %v277, 0.2
    %v294 = vmul.f32 %v282, 0.2
    %v295 = vmul.f32 %v287, 0.2
    %v296 = vsel %vm290, %v277, %v293
    %v297 = vsel %vm291, %v282, %v294
    %v298 = vsel %vm292, %v287, %v295
    %s299 = scalar_lea.vmem [#allocation2], 48
    %v300 = vld [vmem:[%s299] sm:$0xff]
    %v301 = vld [vmem:[%s299 + $0x8] sm:$0xff]
    %v302 = vld [vmem:[%s299 + $0x10] sm:$0xff]
    %v303 = vld [vmem:[%s299 + $0x18] sm:$0xff]
    %v304 = vld [vmem:[%s299 + $0x20] sm:$0xff]
    %v305 = vld [vmem:[%s299 + $0x28] sm:$0xff]
    %s306 = scalar_lea.vmem %s2, 32
    %v307 = vld [vmem:[%s306] sm:$0xff]
    %v308 = vld [vmem:[%s306 + $0x8] sm:$0xff]
    %v310 = vsel %vm47, %v296, 0
    %v313 = vsel %vm47, %v297, 0
    %v316 = vsel %vm47, %v298, 0
    %318 = vmatprep.subr.mxu0 0.0
    %319 = vmatpush1.msra.mxu0 0.0
    %320 = vmatprep.subr.mxu0 0.0
    %321 = vmatpush1.msra.mxu0 0.0
    %322 = vmatprep.subr.mxu0 0.0
    %323 = vmatpush1.msra.mxu0 0.0
    %324 = vmatprep.subr.mxu0 0.0
    %325 = vmatpush1.msra.mxu0 0.0
    %326 = vmatprep.subr.mxu0 0.0
    %327 = vmatpush1.msra.mxu0 0.0
    %328 = vmatprep.subr.mxu0 0.0
    %329 = vmatpush1.msra.mxu0 0.0
    %330 = vmatprep.subr.mxu0 0.0
    %331 = vmatpush1.msra.mxu0 0.0
    %332 = vmatprep.subr.mxu0 0.0
    %333 = vmatpush1.msra.mxu0 0.0
    %334 = vmatprep.subr.mxu0 0.0
    %335 = vmatpush1.msra.mxu0 0.0
    %336 = vmatprep.subr.mxu0 0.0
    %337 = vmatpush1.msra.mxu0 0.0
    %338 = vmatprep.subr.mxu0 0.0
    %339 = vmatpush1.msra.mxu0 0.0
    %340 = vmatprep.subr.mxu0 0.0
    %341 = vmatpush1.msra.mxu0 0.0
    %342 = vmatprep.subr.mxu0 0.0
    %343 = vmatpush1.msra.mxu0 0.0
    %344 = vmatprep.subr.mxu0 0.0
    %345 = vmatpush1.msra.mxu0 0.0
    %346 = vmatprep.subr.mxu0 0.0
    %347 = vmatpush1.msra.mxu0 %v308
    %348 = vmatprep.subr.mxu0 0.0
    %349 = vmatpush1.msra.mxu0 %v307
    %350 = vmatprep.subr.mxu0 0.0
    %351 = vmatpush2.msra.mxu0 0.0
    %352 = vmatprep.subr.mxu0 0.0
    %353 = vmatpush2.msra.mxu0 0.0
    %354 = vmatprep.subr.mxu0 0.0
    %355 = vmatpush2.msra.mxu0 0.0
    %356 = vmatprep.subr.mxu0 0.0
    %357 = vmatpush2.msra.mxu0 0.0
    %358 = vmatprep.subr.mxu0 0.0
    %359 = vmatpush2.msra.mxu0 0.0
    %360 = vmatprep.subr.mxu0 0.0
    %361 = vmatpush2.msra.mxu0 0.0
    %362 = vmatprep.subr.mxu0 0.0
    %363 = vmatpush2.msra.mxu0 0.0
    %364 = vmatprep.subr.mxu0 0.0
    %365 = vmatpush2.msra.mxu0 0.0
    %366 = vmatprep.subr.mxu0 0.0
    %367 = vmatpush2.msra.mxu0 0.0
    %368 = vmatprep.subr.mxu0 0.0
    %369 = vmatpush2.msra.mxu0 0.0
    %370 = vmatprep.subr.mxu0 0.0
    %371 = vmatpush2.msra.mxu0 0.0
    %372 = vmatprep.subr.mxu0 0.0
    %373 = vmatpush2.msra.mxu0 0.0
    %374 = vmatprep.subr.mxu0 0.0
    %375 = vmatpush2.msra.mxu0 0.0
    %376 = vmatprep.subr.mxu0 0.0
    %377 = vmatpush2.msra.mxu0 0.0
    %378 = vmatprep.subr.mxu0 0.0
    %379 = vmatpush2.msra.mxu0 0.0
    %380 = vmatprep.subr.mxu0 0.0
    %381 = vmatpush2.msra.mxu0 0.0
    %382 = vmatprep.mubr.f32.mxu0 0.0
    %383 = vmatmul.mubr.f32.gmra.mxu0 %v310
    %v384 = vpop.f32.mrf.mxu0
    %v385 = vadd.f32 0.0, %v384
    %v386 = vpop.f32.mrf.mxu0
    %387 = vmatprep.mubr.f32.mxu0 0.0
    %388 = vmatmul.mubr.f32.gmra.mxu0 %v313
    %v389 = vpop.f32.mrf.mxu0
    %v390 = vadd.f32 0.0, %v389
    %v391 = vpop.f32.mrf.mxu0
    %392 = vmatprep.mubr.f32.mxu0 0.0
    %393 = vmatmul.mubr.f32.gmra.mxu0 %v316
    %v394 = vpop.f32.mrf.mxu0
    %v395 = vadd.f32 0.0, %v394
    %v396 = vpop.f32.mrf.mxu0
    %397 = vdwg.mxu0
    %401 = vrot.lane.b32.xlu0 %v385, 120
    %v402 = vpop.permute.xlu0 %401
    %403 = vrot.lane.b32.xlu0 %v390, 120
    %v404 = vpop.permute.xlu0 %403
    %405 = vrot.lane.b32.xlu0 %v395, 120
    %v406 = vpop.permute.xlu0 %405
    %410 = vrot.lane.b32.xlu0 %v385, 112
    %v411 = vpop.permute.xlu0 %410
    %412 = vrot.lane.b32.xlu0 %v390, 112
    %v413 = vpop.permute.xlu0 %412
    %414 = vrot.lane.b32.xlu0 %v395, 112
    %v415 = vpop.permute.xlu0 %414
    %420 = vset.pattern.permute.xlu0 72
    %421 = vperm.xlu0 %420, %v300
    %v422 = vpop.permute.xlu0 %421
    %425 = vset.pattern.permute.xlu0 72
    %426 = vperm.xlu0 %425, %v301
    %v427 = vpop.permute.xlu0 %426
    %430 = vset.pattern.permute.xlu0 72
    %431 = vperm.xlu0 %430, %v302
    %v432 = vpop.permute.xlu0 %431
    %435 = vset.pattern.permute.xlu0 72
    %436 = vperm.xlu0 %435, %v303
    %v437 = vpop.permute.xlu0 %436
    %440 = vset.pattern.permute.xlu0 72
    %441 = vperm.xlu0 %440, %v304
    %v442 = vpop.permute.xlu0 %441
    %445 = vset.pattern.permute.xlu0 72
    %446 = vperm.xlu0 %445, %v305
    %v447 = vpop.permute.xlu0 %446
    %vm449 = vcmask 588800
    %v450 = vsel %vm449, %v300, 0
    %v452 = vsel %vm449, %v301, 0
    %v454 = vsel %vm449, %v302, 0
    %v456 = vsel %vm449, %v303, 0
    %v458 = vsel %vm449, %v304, 0
    %v460 = vsel %vm449, %v305, 0
    %462 = vmatprep.subr.mxu0 0.0
    %463 = vmatpush1.msra.mxu0 0.0
    %464 = vmatprep.subr.mxu0 0.0
    %465 = vmatpush1.msra.mxu0 0.0
    %466 = vmatprep.subr.mxu0 0.0
    %467 = vmatpush1.msra.mxu0 0.0
    %468 = vmatprep.subr.mxu0 0.0
    %469 = vmatpush1.msra.mxu0 0.0
    %470 = vmatprep.subr.mxu0 0.0
    %471 = vmatpush1.msra.mxu0 0.0
    %472 = vmatprep.subr.mxu0 0.0
    %473 = vmatpush1.msra.mxu0 0.0
    %474 = vmatprep.subr.mxu0 0.0
    %475 = vmatpush1.msra.mxu0 0.0
    %476 = vmatprep.subr.mxu0 0.0
    %477 = vmatpush1.msra.mxu0 %v415
    %478 = vmatprep.subr.mxu0 0.0
    %479 = vmatpush1.msra.mxu0 %v413
    %480 = vmatprep.subr.mxu0 0.0
    %481 = vmatpush1.msra.mxu0 %v411
    %482 = vmatprep.subr.mxu0 0.0
    %483 = vmatpush1.msra.mxu0 %v406
    %484 = vmatprep.subr.mxu0 0.0
    %485 = vmatpush1.msra.mxu0 %v404
    %486 = vmatprep.subr.mxu0 0.0
    %487 = vmatpush1.msra.mxu0 %v402
    %488 = vmatprep.subr.mxu0 0.0
    %489 = vmatpush1.msra.mxu0 %v395
    %490 = vmatprep.subr.mxu0 0.0
    %491 = vmatpush1.msra.mxu0 %v390
    %492 = vmatprep.subr.mxu0 0.0
    %493 = vmatpush1.msra.mxu0 %v385
    %494 = vmatprep.subr.mxu0 0.0
    %495 = vmatpush2.msra.mxu0 0.0
    %496 = vmatprep.subr.mxu0 0.0
    %497 = vmatpush2.msra.mxu0 0.0
    %498 = vmatprep.subr.mxu0 0.0
    %499 = vmatpush2.msra.mxu0 0.0
    %500 = vmatprep.subr.mxu0 0.0
    %501 = vmatpush2.msra.mxu0 0.0
    %502 = vmatprep.subr.mxu0 0.0
    %503 = vmatpush2.msra.mxu0 0.0
    %504 = vmatprep.subr.mxu0 0.0
    %505 = vmatpush2.msra.mxu0 0.0
    %506 = vmatprep.subr.mxu0 0.0
    %507 = vmatpush2.msra.mxu0 0.0
    %508 = vmatprep.subr.mxu0 0.0
    %509 = vmatpush2.msra.mxu0 0.0
    %510 = vmatprep.subr.mxu0 0.0
    %511 = vmatpush2.msra.mxu0 0.0
    %512 = vmatprep.subr.mxu0 0.0
    %513 = vmatpush2.msra.mxu0 0.0
    %514 = vmatprep.subr.mxu0 0.0
    %515 = vmatpush2.msra.mxu0 0.0
    %516 = vmatprep.subr.mxu0 0.0
    %517 = vmatpush2.msra.mxu0 0.0
    %518 = vmatprep.subr.mxu0 0.0
    %519 = vmatpush2.msra.mxu0 0.0
    %520 = vmatprep.subr.mxu0 0.0
    %521 = vmatpush2.msra.mxu0 0.0
    %522 = vmatprep.subr.mxu0 0.0
    %523 = vmatpush2.msra.mxu0 0.0
    %524 = vmatprep.subr.mxu0 0.0
    %525 = vmatpush2.msra.mxu0 0.0
    %526 = vmatprep.mubr.f32.mxu0 0.0
    %527 = vmatmul.mubr.f32.gmra.mxu0 %v450
    %v528 = vpop.f32.mrf.mxu0
    %v529 = vadd.f32 %v422, %v528
    %v530 = vpop.f32.mrf.mxu0
    %531 = vmatprep.mubr.f32.mxu0 0.0
    %532 = vmatmul.mubr.f32.gmra.mxu0 %v452
    %v533 = vpop.f32.mrf.mxu0
    %v534 = vadd.f32 %v427, %v533
    %v535 = vpop.f32.mrf.mxu0
    %536 = vmatprep.mubr.f32.mxu0 0.0
    %537 = vmatmul.mubr.f32.gmra.mxu0 %v454
    %v538 = vpop.f32.mrf.mxu0
    %v539 = vadd.f32 %v432, %v538
    %v540 = vpop.f32.mrf.mxu0
    %541 = vmatprep.mubr.f32.mxu0 0.0
    %542 = vmatmul.mubr.f32.gmra.mxu0 %v456
    %v543 = vpop.f32.mrf.mxu0
    %v544 = vadd.f32 %v437, %v543
    %v545 = vpop.f32.mrf.mxu0
    %546 = vmatprep.mubr.f32.mxu0 0.0
    %547 = vmatmul.mubr.f32.gmra.mxu0 %v458
    %v548 = vpop.f32.mrf.mxu0
    %v549 = vadd.f32 %v442, %v548
    %v550 = vpop.f32.mrf.mxu0
    %551 = vmatprep.mubr.f32.mxu0 0.0
    %552 = vmatmul.mubr.f32.gmra.mxu0 %v460
    %v553 = vpop.f32.mrf.mxu0
    %v554 = vadd.f32 %v447, %v553
    %v555 = vpop.f32.mrf.mxu0
    %556 = vdwg.mxu0
    %vm557 = vcmp.ge.f32.partialorder %v529, 0.0
    %vm558 = vcmp.ge.f32.partialorder %v534, 0.0
    %vm559 = vcmp.ge.f32.partialorder %v539, 0.0
    %vm560 = vcmp.ge.f32.partialorder %v544, 0.0
    %vm561 = vcmp.ge.f32.partialorder %v549, 0.0
    %vm562 = vcmp.ge.f32.partialorder %v554, 0.0
    %v563 = vmul.f32 %v529, 0.2
    %v564 = vmul.f32 %v534, 0.2
    %v565 = vmul.f32 %v539, 0.2
    %v566 = vmul.f32 %v544, 0.2
    %v567 = vmul.f32 %v549, 0.2
    %v568 = vmul.f32 %v554, 0.2
    %v569 = vsel %vm557, %v529, %v563
    %v570 = vsel %vm558, %v534, %v564
    %v571 = vsel %vm559, %v539, %v565
    %v572 = vsel %vm560, %v544, %v566
    %v573 = vsel %vm561, %v549, %v567
    %v574 = vsel %vm562, %v554, %v568
    %vm575 = vcmask 31744
    %576 = vst.msk [vmem:[%s3] sm:$0xff] %vm575, %v569
    %577 = vst.msk [vmem:[%s3 + $0x8] sm:$0xff] %vm575, %v570
    %578 = vst.msk [vmem:[%s3 + $0x10] sm:$0xff] %vm575, %v571
    %579 = vst.msk [vmem:[%s3 + $0x18] sm:$0xff] %vm575, %v572
    %580 = vst.msk [vmem:[%s3 + $0x20] sm:$0xff] %vm575, %v573
    %581 = vst.msk [vmem:[%s3 + $0x28] sm:$0xff] %vm575, %v574
    %588 = vrot.lane.b32.xlu0 %v569, 124
    %v589 = vpop.permute.xlu0 %588
    %590 = vrot.lane.b32.xlu0 %v570, 124
    %v591 = vpop.permute.xlu0 %590
    %592 = vrot.lane.b32.xlu0 %v571, 124
    %v593 = vpop.permute.xlu0 %592
    %594 = vrot.lane.b32.xlu0 %v572, 124
    %v595 = vpop.permute.xlu0 %594
    %596 = vrot.lane.b32.xlu0 %v573, 124
    %v597 = vpop.permute.xlu0 %596
    %598 = vrot.lane.b32.xlu0 %v574, 124
    %v599 = vpop.permute.xlu0 %598
    %s606 = scalar_lea.vmem %s3, 48
    %607 = vst.msk [vmem:[%s606] sm:$0xff] %vm575, %v589
    %608 = vst.msk [vmem:[%s606 + $0x8] sm:$0xff] %vm575, %v591
    %609 = vst.msk [vmem:[%s606 + $0x10] sm:$0xff] %vm575, %v593
    %610 = vst.msk [vmem:[%s606 + $0x18] sm:$0xff] %vm575, %v595
    %611 = vst.msk [vmem:[%s606 + $0x20] sm:$0xff] %vm575, %v597
    %612 = vst.msk [vmem:[%s606 + $0x28] sm:$0xff] %vm575, %v599
    // Predicated region
    $region18: #{_lambda_.1} parent=1 // pred_check
      _
    $region19: #{_lambda_.1} parent=1 // pred_check_branch
      %614 = sbr.rel (0) target = $region21
    $region20: #{_lambda_.1} parent=1 // pred_region
      _
    $region21: #{_lambda_.1} parent=1 // pred_fallthru
      _
    // Predicated region
    $region22: #{_lambda_.1} parent=1 // pred_check
      _
    $region23: #{_lambda_.1} parent=1 // pred_check_branch
      %616 = sbr.rel (0) target = $region25
    $region24: #{_lambda_.1} parent=1 // pred_region
      _
    $region25: #{_lambda_.1} parent=1 // pred_fallthru
      _
    %617 = vsyncpa [#allocation3], 1

</llo_original>
